<compile_context>
chip_gen: v7x
topology: tpu7x:2x2x1
jax: 0.10.0
libtpu: 0.0.40
codegen_flags: <defaults>
</compile_context>

<pallas_src>
import jax
import jax.numpy as jnp
from jax.experimental import pallas as pl
from jax.experimental.pallas import tpu as pltpu
from jax.scipy.linalg import block_diag


# --------------------------------------------------------------------------
# Kernel: BN-folded, row-packed MLP — 4 dots + bias adds + 3 ReLUs.
# --------------------------------------------------------------------------
def _mlp_kernel(x_ref,
                w1_ref, b1_ref, w2_ref, b2_ref,
                w3_ref, b3_ref, w4_ref, b4_ref,
                o_ref):
    cdt = w1_ref.dtype  # MXU operand dtype (f32 or bf16); accumulation is f32

    # Cast the f32 input tile to the MXU operand dtype here (VPU work hidden
    # under the MXU) instead of paying a separate HBM pass in the wrapper.
    h = jnp.dot(x_ref[...].astype(cdt), w1_ref[...],
                preferred_element_type=jnp.float32) + b1_ref[...]
    h = jnp.maximum(h, 0.0)                      # Dropout = identity (eval)

    h = jnp.dot(h.astype(cdt), w2_ref[...],
                preferred_element_type=jnp.float32) + b2_ref[...]
    h = jnp.maximum(h, 0.0)

    h = jnp.dot(h.astype(cdt), w3_ref[...],
                preferred_element_type=jnp.float32) + b3_ref[...]
    h = jnp.maximum(h, 0.0)

    h = jnp.dot(h.astype(cdt), w4_ref[...],
                preferred_element_type=jnp.float32) + b4_ref[...]

    o_ref[...] = h.astype(o_ref.dtype)


# --------------------------------------------------------------------------
# Generation-aware schedule (packing factor, tile, padded packed-batch).
# --------------------------------------------------------------------------
def _cdiv(a, b):
    return (a + b - 1) // b


def _round_up(a, m):
    return _cdiv(a, m) * m


# Keeps the double-buffered input/output tiles + f32 intermediates well under
# the 16 MiB scoped-VMEM default (smallest across v5e/v6e/v7x) at these widths.
_MAX_PACKED_ROWS_PER_STEP = 4096


def _device_kind():
    try:
        return jax.devices()[0].device_kind.lower()
    except Exception:
        return ""


def _schedule(B, kind, pack=None):
    """Returns (p, tb, Bp_pad): packing factor, packed-row tile, padded packed
    row count.  v5 family: p=2 (128x128 MXU).  v6e/v7x: p=4 (256-wide MXU).
    Single grid step on single-TC chips; two balanced steps on v7x megacore."""
    p = pack if pack is not None else (2 if "v5" in kind else 4)
    Bp = _cdiv(B, p)                               # packed rows needed
    if "v7" in kind and Bp > 16:
        tb = _round_up(_cdiv(Bp, 2), 8)            # 2 equal megacore steps
    else:
        tb = Bp                                    # 1 step: no per-step overhead
    tb = max(1, min(tb, _MAX_PACKED_ROWS_PER_STEP))
    Bp_pad = _round_up(Bp, tb)
    return p, tb, Bp_pad


# --------------------------------------------------------------------------
# Wrapper
# --------------------------------------------------------------------------
def simple_model_forward(x, folded, *, compute_dtype=jnp.float32, pack=None):
    """x: (B, input_size) f32.  folded: dict of BN-folded weights w1..w4
    (in, out) and biases b1..b4 (1, out)."""
    x = jnp.asarray(x)
    B, in_f = x.shape
    out_f = folded["w4"].shape[1]

    kind = _device_kind()
    p, tb, Bp_pad = _schedule(B, kind, pack)

    # Minimal zero-padding: only to the packing/tile alignment.
    B_pad = Bp_pad * p
    if B_pad != B:
        x = jnp.pad(x, ((0, B_pad - B), (0, 0)))

    # Pack p batch rows per physical row: (B_pad, in_f) -> (Bp_pad, in_f*p).
    # Contiguous row-major reshape -> free.
    xp = x.reshape(Bp_pad, in_f * p)

    # Block-diagonally replicated folded params (p copies): fills the MXU's
    # K/N.  Weights in compute dtype (bf16 halves HBM/VMEM traffic), biases
    # f32 so the adds run on the f32 VALU on every generation.
    param_arrays = []
    for l in (1, 2, 3, 4):
        w = folded[f"w{l}"]
        b = folded[f"b{l}"]
        if p > 1:
            w = block_diag(*([w] * p))
            b = jnp.tile(b, (1, p))
        param_arrays.append(w.astype(compute_dtype))
        param_arrays.append(b.astype(jnp.float32))

    def const_spec(shape):
        # full array, same block every grid step (resident in VMEM)
        return pl.BlockSpec(shape, lambda i: (0,) * len(shape))

    param_specs = [const_spec(tuple(pa.shape)) for pa in param_arrays]

    grid = (Bp_pad // tb,)

    # Advisory cost estimate for XLA's scheduler.
    dims = [in_f] + [folded[f"w{l}"].shape[1] for l in (1, 2, 3, 4)]
    flops = 2 * B_pad * sum(dims[i] * dims[i + 1] for i in range(4))
    bytes_accessed = int(
        xp.size * x.dtype.itemsize
        + sum(pa.size * pa.dtype.itemsize for pa in param_arrays)
        + Bp_pad * out_f * p * 4)

    # VMEM footprint estimate: double-buffered x & out tiles, resident params,
    # f32 intermediates.  Raise the scoped limit only when we'd exceed the
    # 16 MiB default (smallest across generations).
    max_h = max(folded[f"w{l}"].shape[1] for l in (1, 2, 3, 4))
    est = (2 * tb * in_f * p * x.dtype.itemsize
           + 2 * tb * out_f * p * 4
           + sum(pa.size * pa.dtype.itemsize for pa in param_arrays)
           + 2 * tb * max_h * p * 4)
    vmem_limit = int(1.5 * est) if est > (14 << 20) else None

    out = pl.pallas_call(
        _mlp_kernel,
        out_shape=jax.ShapeDtypeStruct((Bp_pad, out_f * p), jnp.float32),
        grid_spec=pltpu.PrefetchScalarGridSpec(
            num_scalar_prefetch=0,
            grid=grid,
            in_specs=[pl.BlockSpec((tb, in_f * p), lambda i: (i, 0))]
                     + param_specs,
            out_specs=pl.BlockSpec((tb, out_f * p), lambda i: (i, 0)),
        ),
        compiler_params=pltpu.CompilerParams(
            dimension_semantics=("parallel",),
            vmem_limit_bytes=vmem_limit),
        cost_estimate=pl.CostEstimate(flops=flops, transcendentals=0,
                                      bytes_accessed=bytes_accessed),
    )(xp, *param_arrays)

    # Un-pack: (Bp_pad, out_f*p) -> (B_pad, out_f), slice off padded rows.
    out = out.reshape(Bp_pad * p, out_f)
    return out[:B] if B_pad != B else out


# --------------------------------------------------------------------------
# Parameter construction (PyTorch convention) + BN folding
# --------------------------------------------------------------------------
def make_raw_params(key, input_size, hidden_size, output_size):
    """Deterministic synthetic params matching SimpleModel.__init__ shapes."""
    dims = [input_size, hidden_size * 2, hidden_size, hidden_size // 2,
            output_size]
    keys = jax.random.split(key, 4 * 6)
    ki = 0
    raw = []
    for layer in range(4):
        f_in, f_out = dims[layer], dims[layer + 1]
        gamma = 1.0 + 0.1 * jax.random.normal(keys[ki], (f_in,), jnp.float32); ki += 1
        beta = 0.1 * jax.random.normal(keys[ki], (f_in,), jnp.float32); ki += 1
        rmean = 0.1 * jax.random.normal(keys[ki], (f_in,), jnp.float32); ki += 1
        rvar = 1.0 + 0.1 * jax.random.uniform(keys[ki], (f_in,), jnp.float32); ki += 1
        bound = 1.0 / (f_in ** 0.5)
        w = jax.random.uniform(keys[ki], (f_out, f_in), jnp.float32,
                               minval=-bound, maxval=bound); ki += 1
        b = jax.random.uniform(keys[ki], (f_out,), jnp.float32,
                               minval=-bound, maxval=bound); ki += 1
        raw.append(dict(gamma=gamma, beta=beta, rmean=rmean, rvar=rvar,
                        w=w, b=b))
    return raw


def fold_params(raw, eps=1e-5):
    """Fold eval-mode BatchNorm1d into the following Linear:
       ((x - m)/sqrt(v+eps)*g + b) @ W.T + c  ==  x @ W' + b'
       with s = g/sqrt(v+eps), t = b - m*s, W' = diag(s)@W.T, b' = t@W.T + c."""
    folded = {}
    for l, p in enumerate(raw, start=1):
        s = p["gamma"] / jnp.sqrt(p["rvar"] + eps)           # (f_in,)
        t = p["beta"] - p["rmean"] * s                       # (f_in,)
        wt = p["w"].T                                        # (f_in, f_out)
        folded[f"w{l}"] = wt * s[:, None]
        folded[f"b{l}"] = (t[None, :] @ wt) + p["b"][None, :]
    return folded


# --------------------------------------------------------------------------
# References
# --------------------------------------------------------------------------
def reference_forward(x, raw, eps=1e-5):
    """Unfused eval-mode reference: BN -> Linear -> ReLU (Dropout=identity)."""
    h = x
    for l, p in enumerate(raw):
        h = (h - p["rmean"]) / jnp.sqrt(p["rvar"] + eps) * p["gamma"] + p["beta"]
        h = h @ p["w"].T + p["b"]
        if l < 3:
            h = jnp.maximum(h, 0.0)
    return h


def reference_forward_folded(x, folded, compute_dtype):
    """Mirrors the kernel's dtype handling (used to check the bf16 path)."""
    h = x
    for l in range(1, 5):
        w = folded[f"w{l}"].astype(compute_dtype)
        b = folded[f"b{l}"].astype(jnp.float32)
        h = jnp.dot(h.astype(compute_dtype), w,
                    preferred_element_type=jnp.float32) + b
        if l < 4:
            h = jnp.maximum(h, 0.0)
    return h


# --------------------------------------------------------------------------
if __name__ == "__main__":
    input_size, hidden_size, output_size = 32, 32, 8
    batch = 8

    key = jax.random.PRNGKey(0)
    kx, kp = jax.random.split(key)
    x = jax.random.normal(kx, (batch, input_size), jnp.float32)
    raw = make_raw_params(kp, input_size, hidden_size, output_size)
    folded = fold_params(raw)

    # f32 run: exact eval-mode semantics vs. unfused reference.
    out = jax.block_until_ready(
        simple_model_forward(x, folded, compute_dtype=jnp.float32))
    ref = reference_forward(x, raw)
    assert out.shape == (batch, output_size)
    assert jnp.allclose(out, ref, atol=1e-4, rtol=1e-4), "f32 mismatch vs reference"

    # bf16-weight fast path (recommended on every generation).
    out_bf = jax.block_until_ready(
        simple_model_forward(x, folded, compute_dtype=jnp.bfloat16))
    ref_bf = reference_forward_folded(x, folded, jnp.bfloat16)
    assert jnp.allclose(out_bf, ref_bf, atol=2e-2, rtol=2e-2), "bf16 mismatch"

    # Ragged larger batch: exercises minimal padding, row packing / un-packing
    # and (on v7x) the two-balanced-step megacore grid.
    big_b = 2050
    xb = jax.random.normal(kx, (big_b, input_size), jnp.float32)
    out_big = jax.block_until_ready(
        simple_model_forward(xb, folded, compute_dtype=jnp.bfloat16))
    ref_big = reference_forward_folded(xb, folded, jnp.bfloat16)
    assert out_big.shape == (big_b, output_size)
    assert jnp.allclose(out_big, ref_big, atol=2e-2, rtol=2e-2), "bf16 big-batch mismatch"

    print("KERNEL_OK")
</pallas_src>

<mosaic_0001>
module attributes {stable_mosaic.version = 11 : i64} {
  func.func @_mlp_kernel(%arg0: i32, %arg1: memref<2x128xf32, #tpu.memory_space<vmem>>, %arg2: memref<128x256xf32, #tpu.memory_space<vmem>>, %arg3: memref<1x256xf32, #tpu.memory_space<vmem>>, %arg4: memref<256x128xf32, #tpu.memory_space<vmem>>, %arg5: memref<1x128xf32, #tpu.memory_space<vmem>>, %arg6: memref<128x64xf32, #tpu.memory_space<vmem>>, %arg7: memref<1x64xf32, #tpu.memory_space<vmem>>, %arg8: memref<64x32xf32, #tpu.memory_space<vmem>>, %arg9: memref<1x32xf32, #tpu.memory_space<vmem>>, %arg10: memref<2x32xf32, #tpu.memory_space<vmem>>) attributes {dimension_semantics = [#tpu.dimension_semantics<parallel>], iteration_bounds = array<i64: 1>, scalar_prefetch = 0 : i64, scratch_operands = 0 : i64, tpu.core_type = #tpu.core_type<tc>, window_params = [{transform_indices = @transform_0, window_bounds = array<i64: 2, 128>}, {pipeline_mode = #tpu.pipeline_mode<synchronous>, transform_indices = @transform_1, window_bounds = array<i64: 128, 256>}, {pipeline_mode = #tpu.pipeline_mode<synchronous>, transform_indices = @transform_2, window_bounds = array<i64: 1, 256>}, {pipeline_mode = #tpu.pipeline_mode<synchronous>, transform_indices = @transform_3, window_bounds = array<i64: 256, 128>}, {pipeline_mode = #tpu.pipeline_mode<synchronous>, transform_indices = @transform_4, window_bounds = array<i64: 1, 128>}, {pipeline_mode = #tpu.pipeline_mode<synchronous>, transform_indices = @transform_5, window_bounds = array<i64: 128, 64>}, {pipeline_mode = #tpu.pipeline_mode<synchronous>, transform_indices = @transform_6, window_bounds = array<i64: 1, 64>}, {pipeline_mode = #tpu.pipeline_mode<synchronous>, transform_indices = @transform_7, window_bounds = array<i64: 64, 32>}, {pipeline_mode = #tpu.pipeline_mode<synchronous>, transform_indices = @transform_8, window_bounds = array<i64: 1, 32>}, {transform_indices = @transform_9, window_bounds = array<i64: 2, 32>}]} {
    %c0 = arith.constant 0 : index
    %c0_0 = arith.constant 0 : index
    %0 = vector.load %arg1[%c0, %c0_0] : memref<2x128xf32, #tpu.memory_space<vmem>>, vector<2x128xf32>
    %c0_1 = arith.constant 0 : index
    %c0_2 = arith.constant 0 : index
    %1 = vector.load %arg2[%c0_1, %c0_2] : memref<128x256xf32, #tpu.memory_space<vmem>>, vector<128x256xf32>
    %cst = arith.constant dense<0.000000e+00> : vector<2x256xf32>
    %2 = tpu.matmul %0, %1, %cst {dimension_numbers = #tpu.dot_dimension_numbers<[1], [0], [0], [1], [0, 0, 1, 1], [], []>} : vector<2x128xf32>, vector<128x256xf32>, vector<2x256xf32> -> vector<2x256xf32>
    %c0_3 = arith.constant 0 : index
    %c0_4 = arith.constant 0 : index
    %3 = vector.load %arg3[%c0_3, %c0_4] : memref<1x256xf32, #tpu.memory_space<vmem>>, vector<1x256xf32>
    %4 = vector.broadcast %3 : vector<1x256xf32> to vector<2x256xf32>
    %5 = arith.addf %2, %4 : vector<2x256xf32>
    %cst_5 = arith.constant 0.000000e+00 : f32
    %6 = vector.broadcast %cst_5 : f32 to vector<2x256xf32>
    %7 = arith.maximumf %5, %6 : vector<2x256xf32>
    %c0_6 = arith.constant 0 : index
    %c0_7 = arith.constant 0 : index
    %8 = vector.load %arg4[%c0_6, %c0_7] : memref<256x128xf32, #tpu.memory_space<vmem>>, vector<256x128xf32>
    %cst_8 = arith.constant dense<0.000000e+00> : vector<2x128xf32>
    %9 = tpu.matmul %7, %8, %cst_8 {dimension_numbers = #tpu.dot_dimension_numbers<[1], [0], [0], [1], [0, 0, 1, 1], [], []>} : vector<2x256xf32>, vector<256x128xf32>, vector<2x128xf32> -> vector<2x128xf32>
    %c0_9 = arith.constant 0 : index
    %c0_10 = arith.constant 0 : index
    %10 = vector.load %arg5[%c0_9, %c0_10] : memref<1x128xf32, #tpu.memory_space<vmem>>, vector<1x128xf32>
    %11 = vector.broadcast %10 : vector<1x128xf32> to vector<2x128xf32>
    %12 = arith.addf %9, %11 : vector<2x128xf32>
    %cst_11 = arith.constant 0.000000e+00 : f32
    %13 = vector.broadcast %cst_11 : f32 to vector<2x128xf32>
    %14 = arith.maximumf %12, %13 : vector<2x128xf32>
    %c0_12 = arith.constant 0 : index
    %c0_13 = arith.constant 0 : index
    %15 = vector.load %arg6[%c0_12, %c0_13] : memref<128x64xf32, #tpu.memory_space<vmem>>, vector<128x64xf32>
    %cst_14 = arith.constant dense<0.000000e+00> : vector<2x64xf32>
    %16 = tpu.matmul %14, %15, %cst_14 {dimension_numbers = #tpu.dot_dimension_numbers<[1], [0], [0], [1], [0, 0, 1, 1], [], []>} : vector<2x128xf32>, vector<128x64xf32>, vector<2x64xf32> -> vector<2x64xf32>
    %c0_15 = arith.constant 0 : index
    %c0_16 = arith.constant 0 : index
    %17 = vector.load %arg7[%c0_15, %c0_16] : memref<1x64xf32, #tpu.memory_space<vmem>>, vector<1x64xf32>
    %18 = vector.broadcast %17 : vector<1x64xf32> to vector<2x64xf32>
    %19 = arith.addf %16, %18 : vector<2x64xf32>
    %cst_17 = arith.constant 0.000000e+00 : f32
    %20 = vector.broadcast %cst_17 : f32 to vector<2x64xf32>
    %21 = arith.maximumf %19, %20 : vector<2x64xf32>
    %c0_18 = arith.constant 0 : index
    %c0_19 = arith.constant 0 : index
    %22 = vector.load %arg8[%c0_18, %c0_19] : memref<64x32xf32, #tpu.memory_space<vmem>>, vector<64x32xf32>
    %cst_20 = arith.constant dense<0.000000e+00> : vector<2x32xf32>
    %23 = tpu.matmul %21, %22, %cst_20 {dimension_numbers = #tpu.dot_dimension_numbers<[1], [0], [0], [1], [0, 0, 1, 1], [], []>} : vector<2x64xf32>, vector<64x32xf32>, vector<2x32xf32> -> vector<2x32xf32>
    %c0_21 = arith.constant 0 : index
    %c0_22 = arith.constant 0 : index
    %24 = vector.load %arg9[%c0_21, %c0_22] : memref<1x32xf32, #tpu.memory_space<vmem>>, vector<1x32xf32>
    %25 = vector.broadcast %24 : vector<1x32xf32> to vector<2x32xf32>
    %26 = arith.addf %23, %25 : vector<2x32xf32>
    %c0_23 = arith.constant 0 : index
    %c0_24 = arith.constant 0 : index
    %27 = vector.load %arg10[%c0_23, %c0_24] : memref<2x32xf32, #tpu.memory_space<vmem>>, vector<2x32xf32>
    tpu.vector_store %arg10[%c0_23, %c0_24], %26 {strides = array<i32>} : memref<2x32xf32, #tpu.memory_space<vmem>>, vector<2x32xf32>,
    return
  }
  func.func @transform_0(%arg0: i32) -> (i32, i32) {
    %c0_i32 = arith.constant 0 : i32
    %c0_i32_0 = arith.constant 0 : i32
    return %arg0, %c0_i32 : i32, i32
  }
  func.func @transform_1(%arg0: i32) -> (i32, i32) {
    %c0_i32 = arith.constant 0 : i32
    %c0_i32_0 = arith.constant 0 : i32
    %c0_i32_1 = arith.constant 0 : i32
    return %c0_i32, %c0_i32_0 : i32, i32
  }
  func.func @transform_2(%arg0: i32) -> (i32, i32) {
    %c0_i32 = arith.constant 0 : i32
    %c0_i32_0 = arith.constant 0 : i32
    %c0_i32_1 = arith.constant 0 : i32
    return %c0_i32, %c0_i32_0 : i32, i32
  }
  func.func @transform_3(%arg0: i32) -> (i32, i32) {
    %c0_i32 = arith.constant 0 : i32
    %c0_i32_0 = arith.constant 0 : i32
    %c0_i32_1 = arith.constant 0 : i32
    return %c0_i32, %c0_i32_0 : i32, i32
  }
  func.func @transform_4(%arg0: i32) -> (i32, i32) {
    %c0_i32 = arith.constant 0 : i32
    %c0_i32_0 = arith.constant 0 : i32
    %c0_i32_1 = arith.constant 0 : i32
    return %c0_i32, %c0_i32_0 : i32, i32
  }
  func.func @transform_5(%arg0: i32) -> (i32, i32) {
    %c0_i32 = arith.constant 0 : i32
    %c0_i32_0 = arith.constant 0 : i32
    %c0_i32_1 = arith.constant 0 : i32
    return %c0_i32, %c0_i32_0 : i32, i32
  }
  func.func @transform_6(%arg0: i32) -> (i32, i32) {
    %c0_i32 = arith.constant 0 : i32
    %c0_i32_0 = arith.constant 0 : i32
    %c0_i32_1 = arith.constant 0 : i32
    return %c0_i32, %c0_i32_0 : i32, i32
  }
  func.func @transform_7(%arg0: i32) -> (i32, i32) {
    %c0_i32 = arith.constant 0 : i32
    %c0_i32_0 = arith.constant 0 : i32
    %c0_i32_1 = arith.constant 0 : i32
    return %c0_i32, %c0_i32_0 : i32, i32
  }
  func.func @transform_8(%arg0: i32) -> (i32, i32) {
    %c0_i32 = arith.constant 0 : i32
    %c0_i32_0 = arith.constant 0 : i32
    %c0_i32_1 = arith.constant 0 : i32
    return %c0_i32, %c0_i32_0 : i32, i32
  }
  func.func @transform_9(%arg0: i32) -> (i32, i32) {
    %c0_i32 = arith.constant 0 : i32
    %c0_i32_0 = arith.constant 0 : i32
    return %arg0, %c0_i32 : i32, i32
  }
}

</mosaic_0001>

<llo_original>
// kernel: tpu_custom_call.1
$region0: #{tpu_custom_call.1}
  #allocation0 [shape = 'u32[]', space=smem, size = 0x4, offset = 0x4, fixed_abs, tag = 'smem constant byte address 0x4 - core index']
  #allocation1 [shape = 'u32[144,128]{1,0:T(1,128)}', space=vmem, size = 0x12000, scoped, tag = 'internal scratch']
  %s0 = inlined_call_operand.vmem [shape: f32[2,128], index: 0, kind: input, shape index: {}]
  %s1 = inlined_call_operand.vmem [shape: f32[128,256], index: 1, kind: input, shape index: {}]
  %s2 = inlined_call_operand.vmem [shape: f32[1,256], index: 2, kind: input, shape index: {}]
  %s3 = inlined_call_operand.hbm [shape: f32[256,128], index: 3, kind: input, shape index: {}]
  %s4 = inlined_call_operand.vmem [shape: f32[1,128], index: 4, kind: input, shape index: {}]
  %s5 = inlined_call_operand.vmem [shape: f32[128,64], index: 5, kind: input, shape index: {}]
  %s6 = inlined_call_operand.vmem [shape: f32[1,64], index: 6, kind: input, shape index: {}]
  %s7 = inlined_call_operand.vmem [shape: f32[64,32], index: 7, kind: input, shape index: {}]
  %s8 = inlined_call_operand.vmem [shape: f32[1,32], index: 8, kind: input, shape index: {}]
  %s9 = inlined_call_operand.hbm [shape: f32[2,32], index: 9, kind: output, shape index: {}]
  %s10 = sld [smem:[#allocation0]]
  $region50: #{tpu_custom_call.1} parent=0
    _
  %s12 = ssub.s32 1, %s10
  %s13 = scalar_select 0, %s12, %s10
  $region1: #{tpu_custom_call.1} parent=0
    #allocation2 [shape = 'u8[131072]{0}', space=vmem, size = 0x20000, scoped, tag = 'input window, operand 3, single buffered']
    #allocation3 [shape = 's32[1]{0}', space=sflag, size = 0x4, scoped, tag = 'scoped memory for tpu_custom_call.1']
    #allocation4 [shape = 's32[1]{0}', space=sflag, size = 0x4, scoped, tag = 'scoped memory for tpu_custom_call.1']
    #allocation5 [shape = 'u8[1024]{0}', space=vmem, size = 0x400, scoped, tag = 'output window, operand 0, single buffered']
    %14 = vsyncpa [#allocation3], 0
    %15 = vsyncpa [#allocation4], 0
    // Predicated region
    $region2: #{tpu_custom_call.1} parent=1 // pred_check
      _
    $region3: #{tpu_custom_call.1} parent=1 // pred_check_branch
      %17 = sbr.rel (0) target = $region5
    $region4: #{tpu_custom_call.1} parent=1 // pred_region
      _
    $region5: #{tpu_custom_call.1} parent=1 // pred_fallthru
      _
    // Predicated region
    $region6: #{tpu_custom_call.1} parent=1 // pred_check
      _
    $region7: #{tpu_custom_call.1} parent=1 // pred_check_branch
      %19 = sbr.rel (0) target = $region9
    $region8: #{tpu_custom_call.1} parent=1 // pred_region
      _
    $region9: #{tpu_custom_call.1} parent=1 // pred_fallthru
      _
    // Predicated region
    $region10: #{tpu_custom_call.1} parent=1 // pred_check
      _
    $region11: #{tpu_custom_call.1} parent=1 // pred_check_branch
      %21 = sbr.rel (0) target = $region13
    $region12: #{tpu_custom_call.1} parent=1 // pred_region
      _
    $region13: #{tpu_custom_call.1} parent=1 // pred_fallthru
      _
    // Predicated region
    $region14: #{tpu_custom_call.1} parent=1 // pred_check
      _
    $region15: #{tpu_custom_call.1} parent=1 // pred_check_branch
      %23 = sbr.rel (0) target = $region17
    $region16: #{tpu_custom_call.1} parent=1 // pred_region
      %s25 = ssub.s32 4096, 4096
      %26 = vsyncadd [#allocation3], %s25
      %s27 = sshll.u32 [#allocation2], 4
      %s28 = int_to_ptr.vmem [resolvable:$true] %s27
      %33 = dma.hbm_to_vmem [thread:$0]  %s3, 4096, %s28, [#allocation3], 128, 128, 8
    $region17: #{tpu_custom_call.1} parent=1 // pred_fallthru
      _
    // Predicated region
    $region18: #{tpu_custom_call.1} parent=1 // pred_check
      _
    $region19: #{tpu_custom_call.1} parent=1 // pred_check_branch
      %35 = sbr.rel (0) target = $region21
    $region20: #{tpu_custom_call.1} parent=1 // pred_region
      _
    $region21: #{tpu_custom_call.1} parent=1 // pred_fallthru
      _
    // Predicated region
    $region22: #{tpu_custom_call.1} parent=1 // pred_check
      _
    $region23: #{tpu_custom_call.1} parent=1 // pred_check_branch
      %37 = sbr.rel (0) target = $region25
    $region24: #{tpu_custom_call.1} parent=1 // pred_region
      _
    $region25: #{tpu_custom_call.1} parent=1 // pred_fallthru
      _
    // Predicated region
    $region26: #{tpu_custom_call.1} parent=1 // pred_check
      _
    $region27: #{tpu_custom_call.1} parent=1 // pred_check_branch
      %39 = sbr.rel (0) target = $region29
    $region28: #{tpu_custom_call.1} parent=1 // pred_region
      _
    $region29: #{tpu_custom_call.1} parent=1 // pred_fallthru
      _
    // Predicated region
    $region30: #{tpu_custom_call.1} parent=1 // pred_check
      _
    $region31: #{tpu_custom_call.1} parent=1 // pred_check_branch
      %41 = sbr.rel (0) target = $region33
    $region32: #{tpu_custom_call.1} parent=1 // pred_region
      _
    $region33: #{tpu_custom_call.1} parent=1 // pred_fallthru
      _
    // Predicated region
    $region34: #{tpu_custom_call.1} parent=1 // pred_check
      _
    $region35: #{tpu_custom_call.1} parent=1 // pred_check_branch
      %43 = sbr.rel (0) target = $region37
    $region36: #{tpu_custom_call.1} parent=1 // pred_region
      _
    $region37: #{tpu_custom_call.1} parent=1 // pred_fallthru
      _
    // Predicated region
    $region38: #{tpu_custom_call.1} parent=1 // pred_check
      _
    $region39: #{tpu_custom_call.1} parent=1 // pred_check_branch
      %45 = sbr.rel (0) target = $region41
    $region40: #{tpu_custom_call.1} parent=1 // pred_region
      %46 = dma.done [#allocation3], 4096
    $region41: #{tpu_custom_call.1} parent=1 // pred_fallthru
      _
    %v47 = vld [vmem:[%s0] sm:$0x3]
    %v48 = vld [vmem:[%s1] sm:$0xff]
    %v49 = vld [vmem:[%s1 + $0x8] sm:$0xff]
    %v50 = vld [vmem:[%s1 + $0x10] sm:$0xff]
    %v51 = vld [vmem:[%s1 + $0x18] sm:$0xff]
    %v52 = vld [vmem:[%s1 + $0x20] sm:$0xff]
    %v53 = vld [vmem:[%s1 + $0x28] sm:$0xff]
    %v54 = vld [vmem:[%s1 + $0x30] sm:$0xff]
    %v55 = vld [vmem:[%s1 + $0x38] sm:$0xff]
    %v56 = vld [vmem:[%s1 + $0x40] sm:$0xff]
    %v57 = vld [vmem:[%s1 + $0x48] sm:$0xff]
    %v58 = vld [vmem:[%s1 + $0x50] sm:$0xff]
    %v59 = vld [vmem:[%s1 + $0x58] sm:$0xff]
    %v60 = vld [vmem:[%s1 + $0x60] sm:$0xff]
    %v61 = vld [vmem:[%s1 + $0x68] sm:$0xff]
    %v62 = vld [vmem:[%s1 + $0x70] sm:$0xff]
    %v63 = vld [vmem:[%s1 + $0x78] sm:$0xff]
    %v64 = vld [vmem:[%s1 + $0x80] sm:$0xff]
    %v65 = vld [vmem:[%s1 + $0x88] sm:$0xff]
    %v66 = vld [vmem:[%s1 + $0x90] sm:$0xff]
    %v67 = vld [vmem:[%s1 + $0x98] sm:$0xff]
    %v68 = vld [vmem:[%s1 + $0xa0] sm:$0xff]
    %v69 = vld [vmem:[%s1 + $0xa8] sm:$0xff]
    %v70 = vld [vmem:[%s1 + $0xb0] sm:$0xff]
    %v71 = vld [vmem:[%s1 + $0xb8] sm:$0xff]
    %v72 = vld [vmem:[%s1 + $0xc0] sm:$0xff]
    %v73 = vld [vmem:[%s1 + $0xc8] sm:$0xff]
    %v74 = vld [vmem:[%s1 + $0xd0] sm:$0xff]
    %v75 = vld [vmem:[%s1 + $0xd8] sm:$0xff]
    %v76 = vld [vmem:[%s1 + $0xe0] sm:$0xff]
    %v77 = vld [vmem:[%s1 + $0xe8] sm:$0xff]
    %v78 = vld [vmem:[%s1 + $0xf0] sm:$0xff]
    %v79 = vld [vmem:[%s1 + $0xf8] sm:$0xff]
    %v80 = vld [vmem:[%s2] sm:$0x3]
    %v82 = vlaneseq
    %v83 = vshrl.u32 %v82, 7
    %v84 = vsub.s32 0, %v83
    %v85 = vrot.slane %v80, %v84
    %v86 = vlaneseq
    %v87 = vshrl.u32 %v86, 7
    %v88 = vsub.s32 1, %v87
    %v89 = vrot.slane %v80, %v88
    %92 = vmatprep.subr.mxu0 %v49
    %93 = vmatpush1.msra.mxu0 %v48
    %94 = vmatprep.subr.mxu0 %v51
    %95 = vmatpush1.msra.mxu0 %v50
    %96 = vmatprep.subr.mxu0 %v53
    %97 = vmatpush1.msra.mxu0 %v52
    %98 = vmatprep.subr.mxu0 %v55
    %99 = vmatpush1.msra.mxu0 %v54
    %100 = vmatprep.subr.mxu0 %v57
    %101 = vmatpush1.msra.mxu0 %v56
    %102 = vmatprep.subr.mxu0 %v59
    %103 = vmatpush1.msra.mxu0 %v58
    %104 = vmatprep.subr.mxu0 %v61
    %105 = vmatpush1.msra.mxu0 %v60
    %106 = vmatprep.subr.mxu0 %v63
    %107 = vmatpush1.msra.mxu0 %v62
    %108 = vmatprep.subr.mxu0 %v65
    %109 = vmatpush1.msra.mxu0 %v64
    %110 = vmatprep.subr.mxu0 %v67
    %111 = vmatpush1.msra.mxu0 %v66
    %112 = vmatprep.subr.mxu0 %v69
    %113 = vmatpush1.msra.mxu0 %v68
    %114 = vmatprep.subr.mxu0 %v71
    %115 = vmatpush1.msra.mxu0 %v70
    %116 = vmatprep.subr.mxu0 %v73
    %117 = vmatpush1.msra.mxu0 %v72
    %118 = vmatprep.subr.mxu0 %v75
    %119 = vmatpush1.msra.mxu0 %v74
    %120 = vmatprep.subr.mxu0 %v77
    %121 = vmatpush1.msra.mxu0 %v76
    %122 = vmatprep.subr.mxu0 %v79
    %123 = vmatpush1.msra.mxu0 %v78
    %124 = vmatprep.subr.mxu0 0.0
    %125 = vmatpush1.msra.mxu0 0.0
    %126 = vmatprep.subr.mxu0 0.0
    %127 = vmatpush1.msra.mxu0 0.0
    %128 = vmatprep.subr.mxu0 0.0
    %129 = vmatpush1.msra.mxu0 0.0
    %130 = vmatprep.subr.mxu0 0.0
    %131 = vmatpush1.msra.mxu0 0.0
    %132 = vmatprep.subr.mxu0 0.0
    %133 = vmatpush1.msra.mxu0 0.0
    %134 = vmatprep.subr.mxu0 0.0
    %135 = vmatpush1.msra.mxu0 0.0
    %136 = vmatprep.subr.mxu0 0.0
    %137 = vmatpush1.msra.mxu0 0.0
    %138 = vmatprep.subr.mxu0 0.0
    %139 = vmatpush1.msra.mxu0 0.0
    %140 = vmatprep.subr.mxu0 0.0
    %141 = vmatpush1.msra.mxu0 0.0
    %142 = vmatprep.subr.mxu0 0.0
    %143 = vmatpush1.msra.mxu0 0.0
    %144 = vmatprep.subr.mxu0 0.0
    %145 = vmatpush1.msra.mxu0 0.0
    %146 = vmatprep.subr.mxu0 0.0
    %147 = vmatpush1.msra.mxu0 0.0
    %148 = vmatprep.subr.mxu0 0.0
    %149 = vmatpush1.msra.mxu0 0.0
    %150 = vmatprep.subr.mxu0 0.0
    %151 = vmatpush1.msra.mxu0 0.0
    %152 = vmatprep.subr.mxu0 0.0
    %153 = vmatpush1.msra.mxu0 0.0
    %154 = vmatprep.subr.mxu0 0.0
    %155 = vmatpush1.msra.mxu0 0.0
    %156 = vmatprep.mubr.f32.mxu0 0.0
    %157 = vmatmul.mubr.f32.gmra.mrb[0].mxu0 %v47
    %v158 = vpop.f32.mrb[0].mxu0
    %v159 = vadd.f32 %v85, %v158
    %v160 = vpop.f32.mrb[0].mxu0
    %v161 = vadd.f32 %v89, %v160
    %162 = vdwg.mxu0
    %v163 = vmax.f32 %v159, 0.0
    %v164 = vmax.f32 %v161, 0.0
    %v165 = vld [vmem:[#allocation2] sm:$0xff]
    %v166 = vld [vmem:[#allocation2 + $0x8] sm:$0xff]
    %v167 = vld [vmem:[#allocation2 + $0x10] sm:$0xff]
    %v168 = vld [vmem:[#allocation2 + $0x18] sm:$0xff]
    %v169 = vld [vmem:[#allocation2 + $0x20] sm:$0xff]
    %v170 = vld [vmem:[#allocation2 + $0x28] sm:$0xff]
    %v171 = vld [vmem:[#allocation2 + $0x30] sm:$0xff]
    %v172 = vld [vmem:[#allocation2 + $0x38] sm:$0xff]
    %v173 = vld [vmem:[#allocation2 + $0x40] sm:$0xff]
    %v174 = vld [vmem:[#allocation2 + $0x48] sm:$0xff]
    %v175 = vld [vmem:[#allocation2 + $0x50] sm:$0xff]
    %v176 = vld [vmem:[#allocation2 + $0x58] sm:$0xff]
    %v177 = vld [vmem:[#allocation2 + $0x60] sm:$0xff]
    %v178 = vld [vmem:[#allocation2 + $0x68] sm:$0xff]
    %v179 = vld [vmem:[#allocation2 + $0x70] sm:$0xff]
    %v180 = vld [vmem:[#allocation2 + $0x78] sm:$0xff]
    %v181 = vld [vmem:[#allocation2 + $0x80] sm:$0xff]
    %v182 = vld [vmem:[#allocation2 + $0x88] sm:$0xff]
    %v183 = vld [vmem:[#allocation2 + $0x90] sm:$0xff]
    %v184 = vld [vmem:[#allocation2 + $0x98] sm:$0xff]
    %v185 = vld [vmem:[#allocation2 + $0xa0] sm:$0xff]
    %v186 = vld [vmem:[#allocation2 + $0xa8] sm:$0xff]
    %v187 = vld [vmem:[#allocation2 + $0xb0] sm:$0xff]
    %v188 = vld [vmem:[#allocation2 + $0xb8] sm:$0xff]
    %v189 = vld [vmem:[#allocation2 + $0xc0] sm:$0xff]
    %v190 = vld [vmem:[#allocation2 + $0xc8] sm:$0xff]
    %v191 = vld [vmem:[#allocation2 + $0xd0] sm:$0xff]
    %v192 = vld [vmem:[#allocation2 + $0xd8] sm:$0xff]
    %v193 = vld [vmem:[#allocation2 + $0xe0] sm:$0xff]
    %v194 = vld [vmem:[#allocation2 + $0xe8] sm:$0xff]
    %v195 = vld [vmem:[#allocation2 + $0xf0] sm:$0xff]
    %v196 = vld [vmem:[#allocation2 + $0xf8] sm:$0xff]
    %v197 = vld [vmem:[%s4] sm:$0x1]
    %v199 = vlaneseq
    %v200 = vshrl.u32 %v199, 7
    %v201 = vsub.s32 0, %v200
    %v202 = vrot.slane %v197, %v201
    %204 = vmatprep.subr.mxu0 0.0
    %205 = vmatpush1.msra.mxu0 %v165
    %206 = vmatprep.subr.mxu0 0.0
    %207 = vmatpush1.msra.mxu0 %v166
    %208 = vmatprep.subr.mxu0 0.0
    %209 = vmatpush1.msra.mxu0 %v167
    %210 = vmatprep.subr.mxu0 0.0
    %211 = vmatpush1.msra.mxu0 %v168
    %212 = vmatprep.subr.mxu0 0.0
    %213 = vmatpush1.msra.mxu0 %v169
    %214 = vmatprep.subr.mxu0 0.0
    %215 = vmatpush1.msra.mxu0 %v170
    %216 = vmatprep.subr.mxu0 0.0
    %217 = vmatpush1.msra.mxu0 %v171
    %218 = vmatprep.subr.mxu0 0.0
    %219 = vmatpush1.msra.mxu0 %v172
    %220 = vmatprep.subr.mxu0 0.0
    %221 = vmatpush1.msra.mxu0 %v173
    %222 = vmatprep.subr.mxu0 0.0
    %223 = vmatpush1.msra.mxu0 %v174
    %224 = vmatprep.subr.mxu0 0.0
    %225 = vmatpush1.msra.mxu0 %v175
    %226 = vmatprep.subr.mxu0 0.0
    %227 = vmatpush1.msra.mxu0 %v176
    %228 = vmatprep.subr.mxu0 0.0
    %229 = vmatpush1.msra.mxu0 %v177
    %230 = vmatprep.subr.mxu0 0.0
    %231 = vmatpush1.msra.mxu0 %v178
    %232 = vmatprep.subr.mxu0 0.0
    %233 = vmatpush1.msra.mxu0 %v179
    %234 = vmatprep.subr.mxu0 0.0
    %235 = vmatpush1.msra.mxu0 %v180
    %236 = vmatprep.subr.mxu0 0.0
    %237 = vmatpush1.msra.mxu0 %v181
    %238 = vmatprep.subr.mxu0 0.0
    %239 = vmatpush1.msra.mxu0 %v182
    %240 = vmatprep.subr.mxu0 0.0
    %241 = vmatpush1.msra.mxu0 %v183
    %242 = vmatprep.subr.mxu0 0.0
    %243 = vmatpush1.msra.mxu0 %v184
    %244 = vmatprep.subr.mxu0 0.0
    %245 = vmatpush1.msra.mxu0 %v185
    %246 = vmatprep.subr.mxu0 0.0
    %247 = vmatpush1.msra.mxu0 %v186
    %248 = vmatprep.subr.mxu0 0.0
    %249 = vmatpush1.msra.mxu0 %v187
    %250 = vmatprep.subr.mxu0 0.0
    %251 = vmatpush1.msra.mxu0 %v188
    %252 = vmatprep.subr.mxu0 0.0
    %253 = vmatpush1.msra.mxu0 %v189
    %254 = vmatprep.subr.mxu0 0.0
    %255 = vmatpush1.msra.mxu0 %v190
    %256 = vmatprep.subr.mxu0 0.0
    %257 = vmatpush1.msra.mxu0 %v191
    %258 = vmatprep.subr.mxu0 0.0
    %259 = vmatpush1.msra.mxu0 %v192
    %260 = vmatprep.subr.mxu0 0.0
    %261 = vmatpush1.msra.mxu0 %v193
    %262 = vmatprep.subr.mxu0 0.0
    %263 = vmatpush1.msra.mxu0 %v194
    %264 = vmatprep.subr.mxu0 0.0
    %265 = vmatpush1.msra.mxu0 %v195
    %266 = vmatprep.subr.mxu0 0.0
    %267 = vmatpush1.msra.mxu0 %v196
    %268 = vmatprep.mubr.f32.mxu0 %v164
    %269 = vmatmul.mubr.f32.gmra.mrb[0].mxu0 %v163
    %v270 = vpop.f32.mrb[0].mxu0
    %v271 = vadd.f32 %v202, %v270
    %v272 = vpop.f32.mrb[0].mxu0
    %273 = vdwg.mxu0
    %v274 = vmax.f32 %v271, 0.0
    %v275 = vld [vmem:[%s5] sm:$0xff]
    %v276 = vld [vmem:[%s5 + $0x8] sm:$0xff]
    %v277 = vld [vmem:[%s5 + $0x10] sm:$0xff]
    %v278 = vld [vmem:[%s5 + $0x18] sm:$0xff]
    %v279 = vld [vmem:[%s5 + $0x20] sm:$0xff]
    %v280 = vld [vmem:[%s5 + $0x28] sm:$0xff]
    %v281 = vld [vmem:[%s5 + $0x30] sm:$0xff]
    %v282 = vld [vmem:[%s5 + $0x38] sm:$0xff]
    %v283 = vld [vmem:[%s5 + $0x40] sm:$0xff]
    %v284 = vld [vmem:[%s5 + $0x48] sm:$0xff]
    %v285 = vld [vmem:[%s5 + $0x50] sm:$0xff]
    %v286 = vld [vmem:[%s5 + $0x58] sm:$0xff]
    %v287 = vld [vmem:[%s5 + $0x60] sm:$0xff]
    %v288 = vld [vmem:[%s5 + $0x68] sm:$0xff]
    %v289 = vld [vmem:[%s5 + $0x70] sm:$0xff]
    %v290 = vld [vmem:[%s5 + $0x78] sm:$0xff]
    %v291 = vld [vmem:[%s6] sm:$0x1]
    %v293 = vlaneseq
    %v294 = vshrl.u32 %v293, 7
    %v295 = vsub.s32 0, %v294
    %v296 = vrot.slane %v291, %v295
    %298 = vmatprep.subr.mxu0 0.0
    %299 = vmatpush1.msra.mxu0 %v275
    %300 = vmatprep.subr.mxu0 0.0
    %301 = vmatpush1.msra.mxu0 %v276
    %302 = vmatprep.subr.mxu0 0.0
    %303 = vmatpush1.msra.mxu0 %v277
    %304 = vmatprep.subr.mxu0 0.0
    %305 = vmatpush1.msra.mxu0 %v278
    %306 = vmatprep.subr.mxu0 0.0
    %307 = vmatpush1.msra.mxu0 %v279
    %308 = vmatprep.subr.mxu0 0.0
    %309 = vmatpush1.msra.mxu0 %v280
    %310 = vmatprep.subr.mxu0 0.0
    %311 = vmatpush1.msra.mxu0 %v281
    %312 = vmatprep.subr.mxu0 0.0
    %313 = vmatpush1.msra.mxu0 %v282
    %314 = vmatprep.subr.mxu0 0.0
    %315 = vmatpush1.msra.mxu0 %v283
    %316 = vmatprep.subr.mxu0 0.0
    %317 = vmatpush1.msra.mxu0 %v284
    %318 = vmatprep.subr.mxu0 0.0
    %319 = vmatpush1.msra.mxu0 %v285
    %320 = vmatprep.subr.mxu0 0.0
    %321 = vmatpush1.msra.mxu0 %v286
    %322 = vmatprep.subr.mxu0 0.0
    %323 = vmatpush1.msra.mxu0 %v287
    %324 = vmatprep.subr.mxu0 0.0
    %325 = vmatpush1.msra.mxu0 %v288
    %326 = vmatprep.subr.mxu0 0.0
    %327 = vmatpush1.msra.mxu0 %v289
    %328 = vmatprep.subr.mxu0 0.0
    %329 = vmatpush1.msra.mxu0 %v290
    %330 = vmatprep.subr.mxu0 0.0
    %331 = vmatpush1.msra.mxu0 0.0
    %332 = vmatprep.subr.mxu0 0.0
    %333 = vmatpush1.msra.mxu0 0.0
    %334 = vmatprep.subr.mxu0 0.0
    %335 = vmatpush1.msra.mxu0 0.0
    %336 = vmatprep.subr.mxu0 0.0
    %337 = vmatpush1.msra.mxu0 0.0
    %338 = vmatprep.subr.mxu0 0.0
    %339 = vmatpush1.msra.mxu0 0.0
    %340 = vmatprep.subr.mxu0 0.0
    %341 = vmatpush1.msra.mxu0 0.0
    %342 = vmatprep.subr.mxu0 0.0
    %343 = vmatpush1.msra.mxu0 0.0
    %344 = vmatprep.subr.mxu0 0.0
    %345 = vmatpush1.msra.mxu0 0.0
    %346 = vmatprep.subr.mxu0 0.0
    %347 = vmatpush1.msra.mxu0 0.0
    %348 = vmatprep.subr.mxu0 0.0
    %349 = vmatpush1.msra.mxu0 0.0
    %350 = vmatprep.subr.mxu0 0.0
    %351 = vmatpush1.msra.mxu0 0.0
    %352 = vmatprep.subr.mxu0 0.0
    %353 = vmatpush1.msra.mxu0 0.0
    %354 = vmatprep.subr.mxu0 0.0
    %355 = vmatpush1.msra.mxu0 0.0
    %356 = vmatprep.subr.mxu0 0.0
    %357 = vmatpush1.msra.mxu0 0.0
    %358 = vmatprep.subr.mxu0 0.0
    %359 = vmatpush1.msra.mxu0 0.0
    %360 = vmatprep.subr.mxu0 0.0
    %361 = vmatpush1.msra.mxu0 0.0
    %362 = vmatprep.mubr.f32.mxu0 0.0
    %363 = vmatmul.mubr.f32.gmra.mrb[0].mxu0 %v274
    %v364 = vpop.f32.mrb[0].mxu0
    %v365 = vadd.f32 %v296, %v364
    %v366 = vpop.f32.mrb[0].mxu0
    %367 = vdwg.mxu0
    %v368 = vmax.f32 %v365, 0.0
    %v369 = vld [vmem:[%s7] sm:$0xff]
    %v370 = vld [vmem:[%s7 + $0x8] sm:$0xff]
    %v371 = vld [vmem:[%s7 + $0x10] sm:$0xff]
    %v372 = vld [vmem:[%s7 + $0x18] sm:$0xff]
    %v373 = vld [vmem:[%s7 + $0x20] sm:$0xff]
    %v374 = vld [vmem:[%s7 + $0x28] sm:$0xff]
    %v375 = vld [vmem:[%s7 + $0x30] sm:$0xff]
    %v376 = vld [vmem:[%s7 + $0x38] sm:$0xff]
    %v377 = vld [vmem:[%s8] sm:$0x1]
    %v379 = vlaneseq
    %v380 = vshrl.u32 %v379, 7
    %v381 = vsub.s32 0, %v380
    %v382 = vrot.slane %v377, %v381
    %vm384 = vcmask 523264
    %v386 = vsel %vm384, %v368, 0
    %388 = vmatprep.subr.mxu0 0.0
    %389 = vmatpush1.msra.mxu0 %v369
    %390 = vmatprep.subr.mxu0 0.0
    %391 = vmatpush1.msra.mxu0 %v370
    %392 = vmatprep.subr.mxu0 0.0
    %393 = vmatpush1.msra.mxu0 %v371
    %394 = vmatprep.subr.mxu0 0.0
    %395 = vmatpush1.msra.mxu0 %v372
    %396 = vmatprep.subr.mxu0 0.0
    %397 = vmatpush1.msra.mxu0 %v373
    %398 = vmatprep.subr.mxu0 0.0
    %399 = vmatpush1.msra.mxu0 %v374
    %400 = vmatprep.subr.mxu0 0.0
    %401 = vmatpush1.msra.mxu0 %v375
    %402 = vmatprep.subr.mxu0 0.0
    %403 = vmatpush1.msra.mxu0 %v376
    %404 = vmatprep.subr.mxu0 0.0
    %405 = vmatpush1.msra.mxu0 0.0
    %406 = vmatprep.subr.mxu0 0.0
    %407 = vmatpush1.msra.mxu0 0.0
    %408 = vmatprep.subr.mxu0 0.0
    %409 = vmatpush1.msra.mxu0 0.0
    %410 = vmatprep.subr.mxu0 0.0
    %411 = vmatpush1.msra.mxu0 0.0
    %412 = vmatprep.subr.mxu0 0.0
    %413 = vmatpush1.msra.mxu0 0.0
    %414 = vmatprep.subr.mxu0 0.0
    %415 = vmatpush1.msra.mxu0 0.0
    %416 = vmatprep.subr.mxu0 0.0
    %417 = vmatpush1.msra.mxu0 0.0
    %418 = vmatprep.subr.mxu0 0.0
    %419 = vmatpush1.msra.mxu0 0.0
    %420 = vmatprep.subr.mxu0 0.0
    %421 = vmatpush1.msra.mxu0 0.0
    %422 = vmatprep.subr.mxu0 0.0
    %423 = vmatpush1.msra.mxu0 0.0
    %424 = vmatprep.subr.mxu0 0.0
    %425 = vmatpush1.msra.mxu0 0.0
    %426 = vmatprep.subr.mxu0 0.0
    %427 = vmatpush1.msra.mxu0 0.0
    %428 = vmatprep.subr.mxu0 0.0
    %429 = vmatpush1.msra.mxu0 0.0
    %430 = vmatprep.subr.mxu0 0.0
    %431 = vmatpush1.msra.mxu0 0.0
    %432 = vmatprep.subr.mxu0 0.0
    %433 = vmatpush1.msra.mxu0 0.0
    %434 = vmatprep.subr.mxu0 0.0
    %435 = vmatpush1.msra.mxu0 0.0
    %436 = vmatprep.subr.mxu0 0.0
    %437 = vmatpush1.msra.mxu0 0.0
    %438 = vmatprep.subr.mxu0 0.0
    %439 = vmatpush1.msra.mxu0 0.0
    %440 = vmatprep.subr.mxu0 0.0
    %441 = vmatpush1.msra.mxu0 0.0
    %442 = vmatprep.subr.mxu0 0.0
    %443 = vmatpush1.msra.mxu0 0.0
    %444 = vmatprep.subr.mxu0 0.0
    %445 = vmatpush1.msra.mxu0 0.0
    %446 = vmatprep.subr.mxu0 0.0
    %447 = vmatpush1.msra.mxu0 0.0
    %448 = vmatprep.subr.mxu0 0.0
    %449 = vmatpush1.msra.mxu0 0.0
    %450 = vmatprep.subr.mxu0 0.0
    %451 = vmatpush1.msra.mxu0 0.0
    %452 = vmatprep.mubr.f32.mxu0 0.0
    %453 = vmatmul.mubr.f32.gmra.mrb[0].mxu0 %v386
    %v454 = vpop.f32.mrb[0].mxu0
    %v455 = vadd.f32 %v382, %v454
    %v456 = vpop.f32.mrb[0].mxu0
    %457 = vdwg.mxu0
    %vm458 = vcmask 254976
    %459 = vst.msk [vmem:[#allocation5] sm:$0x3] %vm458, %v455
    // Predicated region
    $region42: #{tpu_custom_call.1} parent=1 // pred_check
      _
    $region43: #{tpu_custom_call.1} parent=1 // pred_check_branch
      %461 = sbr.rel (0) target = $region45
    $region44: #{tpu_custom_call.1} parent=1 // pred_region
      %s463 = ssub.s32 32, 32
      %464 = vsyncadd [#allocation4], %s463
      %s466 = sshll.u32 [#allocation5], 4
      %s467 = int_to_ptr.vmem [resolvable:$true] %s466
      %469 = dma.vmem_to_hbm [thread:$0]  %s467, 32, %s9, [#allocation4]
    $region45: #{tpu_custom_call.1} parent=1 // pred_fallthru
      _
    // Predicated region
    $region46: #{tpu_custom_call.1} parent=1 // pred_check
      _
    $region47: #{tpu_custom_call.1} parent=1 // pred_check_branch
      %471 = sbr.rel (0) target = $region49
    $region48: #{tpu_custom_call.1} parent=1 // pred_region
      %472 = dma.done [#allocation4], 32
    $region49: #{tpu_custom_call.1} parent=1 // pred_fallthru
      _
    %473 = vsyncpa [#allocation3], 1
    %474 = vsyncpa [#allocation4], 1

</llo_original>
